<compile_context>
chip_gen: v7x
topology: tpu7x:2x2x1
jax: 0.10.0
libtpu: 0.0.40
codegen_flags: <defaults>
</compile_context>

<pallas_src>
import jax
import jax.numpy as jnp
from jax.experimental import pallas as pl
from jax.experimental.pallas import tpu as pltpu


def preact_kernel(x_ref, params_ref, o_ref):
    # x_ref/o_ref: (TM, Lp)  lane-dense rows (one row == one (n, c) image plane)
    # params_ref: (TM, 3)    columns = [bn_scale, bn_bias, prelu_alpha], f32
    x = x_ref[...].astype(jnp.float32)
    p = params_ref[...]
    scale = p[:, 0:1]
    bias = p[:, 1:2]
    alpha = p[:, 2:3]
    xb = x * scale + bias                                       # folded BatchNorm
    o_ref[...] = jnp.where(xb > 0, xb, alpha * xb).astype(o_ref.dtype)  # PReLU


def _vmem_capacity_bytes() -> int:
    try:
        return int(pltpu.get_tpu_info().vmem_capacity_bytes)
    except Exception:
        return 64 * 1024 * 1024  # conservative (v7x-sized) fallback


def _select_row_tile(rows, lanes, itemsize, row_align, vmem_budget, min_steps):
    """Largest aligned row tile whose double-buffered footprint fits the budget."""
    # Per-row bytes per pipeline buffer: input tile + output tile + params block
    # (lane-padded to 128, f32).  BlockSpec double-buffers everything -> x2.
    bytes_per_row = 2 * (2 * lanes * itemsize + 128 * 4)
    budget_rows = max(row_align, vmem_budget // bytes_per_row)
    split_rows = pl.cdiv(rows, min_steps)       # force >= min_steps grid steps
    tm = min(rows, budget_rows, split_rows)
    tm = max(row_align, (tm // row_align) * row_align)
    return tm


def pre_activation(x, gamma, beta, running_mean, running_var, alpha, bn_eps):
    """PreActivation forward: eval-mode BatchNorm2d (folded) + per-channel PReLU."""
    N, C, H, W = x.shape
    R, L = N * C, H * W
    itemsize = jnp.dtype(x.dtype).itemsize

    # Fold BN running stats + affine into per-channel scale/bias (f32 math).
    inv_std = jax.lax.rsqrt(running_var.astype(jnp.float32) + jnp.float32(bn_eps))
    scale_c = gamma.astype(jnp.float32) * inv_std                       # (C,)
    bias_c = beta.astype(jnp.float32) - running_mean.astype(jnp.float32) * scale_c

    # PReLU slope: accept per-channel (C,) or scalar (num_parameters=1).
    alpha_c = jnp.broadcast_to(jnp.asarray(alpha, jnp.float32).reshape(-1), (C,))

    # Pack per-channel params into one (R, 3) slab (row index = n*C + c).
    params = jnp.tile(jnp.stack([scale_c, bias_c, alpha_c], axis=-1), (N, 1))

    # Lane-dense reshape; pad L to a multiple of 128 for unmasked vst.
    L_pad = pl.cdiv(L, 128) * 128
    x2 = x.reshape(R, L)

    # Generation-aware tile selection + row padding to an exact multiple of tm.
    vmem_cap = _vmem_capacity_bytes()
    row_align = 16 if itemsize < 4 else 8       # bf16 sublane packing needs 16
    tm = _select_row_tile(R, L_pad, itemsize, row_align,
                          vmem_budget=vmem_cap // 4, min_steps=2)
    R_pad = pl.cdiv(R, tm) * tm

    if (R_pad, L_pad) != (R, L):
        x2 = jnp.pad(x2, ((0, R_pad - R), (0, L_pad - L)))
    if R_pad != R:
        params = jnp.pad(params, ((0, R_pad - R), (0, 0)))

    grid = (R_pad // tm,)
    cost = pl.CostEstimate(
        flops=5 * R * L,
        bytes_accessed=2 * R * L * itemsize + R * 3 * 4,
        transcendentals=0,
    )

    out2 = pl.pallas_call(
        preact_kernel,
        out_shape=jax.ShapeDtypeStruct((R_pad, L_pad), x.dtype),
        grid=grid,
        in_specs=[
            pl.BlockSpec((tm, L_pad), lambda i: (i, 0)),
            pl.BlockSpec((tm, 3), lambda i: (i, 0)),
        ],
        out_specs=pl.BlockSpec((tm, L_pad), lambda i: (i, 0)),
        compiler_params=pltpu.CompilerParams(
            # Rows are independent -> "parallel" lets v7x shard the grid across
            # its two TensorCores; on v5e/v6e it's a serial loop.
            dimension_semantics=("parallel",),
            # Headroom above the tile budget; <= half of physical VMEM on all
            # of v5e/v6e (128 MiB) and v7x (64 MiB).
            vmem_limit_bytes=int(vmem_cap // 2),
        ),
        cost_estimate=cost,
    )(x2, params)

    if (R_pad, L_pad) != (R, L):
        out2 = out2[:R, :L]
    return out2.reshape(N, C, H, W)


def reference(x, gamma, beta, running_mean, running_var, alpha, bn_eps):
    """Pure-JAX reference mirroring the PyTorch forward (eval-mode BN)."""
    N, C, H, W = x.shape
    g = gamma.reshape(1, C, 1, 1)
    b = beta.reshape(1, C, 1, 1)
    rm = running_mean.reshape(1, C, 1, 1)
    rv = running_var.reshape(1, C, 1, 1)
    a = alpha.reshape(1, C, 1, 1)
    xb = (x - rm) / jnp.sqrt(rv + bn_eps) * g + b
    return jnp.where(xb > 0, xb, a * xb)


if __name__ == "__main__":
    key = jax.random.PRNGKey(0)
    N, C, H, W = 2, 4, 16, 16
    bn_eps = 1e-5

    k1, k2, k3, k4, k5, k6 = jax.random.split(key, 6)
    x = jax.random.normal(k1, (N, C, H, W), jnp.float32)
    gamma = 1.0 + 0.1 * jax.random.normal(k2, (C,), jnp.float32)
    beta = 0.1 * jax.random.normal(k3, (C,), jnp.float32)
    running_mean = 0.1 * jax.random.normal(k4, (C,), jnp.float32)
    running_var = jax.random.uniform(k5, (C,), jnp.float32, minval=0.5, maxval=1.5)
    alpha = jax.random.uniform(k6, (C,), jnp.float32, minval=0.05, maxval=0.4)

    out = pre_activation(x, gamma, beta, running_mean, running_var, alpha, bn_eps)
    out = jax.block_until_ready(out)

    ref = reference(x, gamma, beta, running_mean, running_var, alpha, bn_eps)
    assert out.shape == (N, C, H, W)
    assert jnp.allclose(out, ref, atol=1e-5, rtol=1e-5), "kernel mismatch vs reference"
    print("KERNEL_OK")
</pallas_src>

<mosaic_0001>
module attributes {stable_mosaic.version = 11 : i64} {
  func.func @preact_kernel(%arg0: i32, %arg1: memref<8x256xf32, #tpu.memory_space<vmem>>, %arg2: memref<8x3xf32, #tpu.memory_space<vmem>>, %arg3: memref<8x256xf32, #tpu.memory_space<vmem>>) attributes {dimension_semantics = [#tpu.dimension_semantics<parallel>], iteration_bounds = array<i64: 1>, scalar_prefetch = 0 : i64, scratch_operands = 0 : i64, tpu.core_type = #tpu.core_type<tc>, window_params = [{transform_indices = @transform_0, window_bounds = array<i64: 8, 256>}, {transform_indices = @transform_1, window_bounds = array<i64: 8, 3>}, {transform_indices = @transform_2, window_bounds = array<i64: 8, 256>}]} {
    %c0 = arith.constant 0 : index
    %c0_0 = arith.constant 0 : index
    %0 = vector.load %arg1[%c0, %c0_0] : memref<8x256xf32, #tpu.memory_space<vmem>>, vector<8x256xf32>
    %c0_1 = arith.constant 0 : index
    %c0_2 = arith.constant 0 : index
    %1 = vector.load %arg2[%c0_1, %c0_2] : memref<8x3xf32, #tpu.memory_space<vmem>>, vector<8x3xf32>
    %2 = vector.extract_strided_slice %1 {offsets = [0, 0], sizes = [8, 1], strides = [1, 1]} : vector<8x3xf32> to vector<8x1xf32>
    %3 = vector.extract_strided_slice %1 {offsets = [0, 1], sizes = [8, 1], strides = [1, 1]} : vector<8x3xf32> to vector<8x1xf32>
    %4 = vector.extract_strided_slice %1 {offsets = [0, 2], sizes = [8, 1], strides = [1, 1]} : vector<8x3xf32> to vector<8x1xf32>
    %5 = vector.broadcast %2 : vector<8x1xf32> to vector<8x256xf32>
    %6 = arith.mulf %0, %5 : vector<8x256xf32>
    %7 = vector.broadcast %3 : vector<8x1xf32> to vector<8x256xf32>
    %8 = arith.addf %6, %7 : vector<8x256xf32>
    %cst = arith.constant 0.000000e+00 : f32
    %9 = vector.broadcast %cst : f32 to vector<8x256xf32>
    %10 = arith.cmpf ogt, %8, %9 : vector<8x256xf32>
    %11 = vector.broadcast %4 : vector<8x1xf32> to vector<8x256xf32>
    %12 = arith.mulf %11, %8 : vector<8x256xf32>
    %13 = arith.select %10, %8, %12 : vector<8x256xi1>, vector<8x256xf32>
    %c0_3 = arith.constant 0 : index
    %c0_4 = arith.constant 0 : index
    %14 = vector.load %arg3[%c0_3, %c0_4] : memref<8x256xf32, #tpu.memory_space<vmem>>, vector<8x256xf32>
    tpu.vector_store %arg3[%c0_3, %c0_4], %13 {strides = array<i32>} : memref<8x256xf32, #tpu.memory_space<vmem>>, vector<8x256xf32>,
    return
  }
  func.func @transform_0(%arg0: i32) -> (i32, i32) {
    %c0_i32 = arith.constant 0 : i32
    %c0_i32_0 = arith.constant 0 : i32
    return %arg0, %c0_i32 : i32, i32
  }
  func.func @transform_1(%arg0: i32) -> (i32, i32) {
    %c0_i32 = arith.constant 0 : i32
    %c0_i32_0 = arith.constant 0 : i32
    return %arg0, %c0_i32 : i32, i32
  }
  func.func @transform_2(%arg0: i32) -> (i32, i32) {
    %c0_i32 = arith.constant 0 : i32
    %c0_i32_0 = arith.constant 0 : i32
    return %arg0, %c0_i32 : i32, i32
  }
}

</mosaic_0001>

<llo_original>
// kernel: tpu_custom_call.1
$region0: #{tpu_custom_call.1}
  #allocation0 [shape = 'u32[]', space=smem, size = 0x4, offset = 0x4, fixed_abs, tag = 'smem constant byte address 0x4 - core index']
  #allocation1 [shape = 'u32[144,128]{1,0:T(1,128)}', space=vmem, size = 0x12000, scoped, tag = 'internal scratch']
  %s0 = inlined_call_operand.hbm [shape: f32[8,256], index: 0, kind: input, shape index: {}]
  %s1 = inlined_call_operand.vmem [shape: f32[8,3], index: 1, kind: input, shape index: {}]
  %s2 = inlined_call_operand.hbm [shape: f32[8,256], index: 2, kind: output, shape index: {}]
  %s3 = sld [smem:[#allocation0]]
  $region22: #{tpu_custom_call.1} parent=0
    _
  %s5 = ssub.s32 1, %s3
  %s6 = scalar_select 0, %s5, %s3
  $region1: #{tpu_custom_call.1} parent=0
    #allocation2 [shape = 'u8[8192]{0}', space=vmem, size = 0x2000, scoped, tag = 'input window, operand 0, single buffered']
    #allocation3 [shape = 's32[1]{0}', space=sflag, size = 0x4, scoped, tag = 'scoped memory for tpu_custom_call.1']
    #allocation4 [shape = 's32[1]{0}', space=sflag, size = 0x4, scoped, tag = 'scoped memory for tpu_custom_call.1']
    #allocation5 [shape = 'u8[8192]{0}', space=vmem, size = 0x2000, scoped, tag = 'output window, operand 0, single buffered']
    %7 = vsyncpa [#allocation3], 0
    %8 = vsyncpa [#allocation4], 0
    // Predicated region
    $region2: #{tpu_custom_call.1} parent=1 // pred_check
      _
    $region3: #{tpu_custom_call.1} parent=1 // pred_check_branch
      %10 = sbr.rel (0) target = $region5
    $region4: #{tpu_custom_call.1} parent=1 // pred_region
      %s12 = ssub.s32 256, 256
      %13 = vsyncadd [#allocation3], %s12
      %s15 = sshll.u32 [#allocation2], 4
      %s16 = int_to_ptr.vmem [resolvable:$true] %s15
      %18 = dma.hbm_to_vmem [thread:$0]  %s0, 256, %s16, [#allocation3]
    $region5: #{tpu_custom_call.1} parent=1 // pred_fallthru
      _
    // Predicated region
    $region6: #{tpu_custom_call.1} parent=1 // pred_check
      _
    $region7: #{tpu_custom_call.1} parent=1 // pred_check_branch
      %20 = sbr.rel (0) target = $region9
    $region8: #{tpu_custom_call.1} parent=1 // pred_region
      _
    $region9: #{tpu_custom_call.1} parent=1 // pred_fallthru
      _
    // Predicated region
    $region10: #{tpu_custom_call.1} parent=1 // pred_check
      _
    $region11: #{tpu_custom_call.1} parent=1 // pred_check_branch
      %22 = sbr.rel (0) target = $region13
    $region12: #{tpu_custom_call.1} parent=1 // pred_region
      %23 = dma.done [#allocation3], 256
    $region13: #{tpu_custom_call.1} parent=1 // pred_fallthru
      _
    %v24 = vld [vmem:[#allocation2] sm:$0xff]
    %v25 = vld [vmem:[#allocation2 + $0x8] sm:$0xff]
    %v26 = vld [vmem:[%s1] sm:$0xff]
    %28 = vset.pattern.permute.xlu0 0
    %29 = vperm.xlu0 %28, %v26
    %v30 = vpop.permute.xlu0 %29
    %v32 = vmul.f32 %v24, %v30
    %v33 = vmul.f32 %v25, %v30
    %34 = vset.pattern.permute.xlu0 1
    %35 = vperm.xlu0 %34, %v26
    %v36 = vpop.permute.xlu0 %35
    %v38 = vadd.f32 %v32, %v36
    %v39 = vadd.f32 %v33, %v36
    %vm40 = vcmp.gt.f32.partialorder %v38, 0.0
    %vm41 = vcmp.gt.f32.partialorder %v39, 0.0
    %42 = vset.pattern.permute.xlu0 2
    %43 = vperm.xlu0 %42, %v26
    %v44 = vpop.permute.xlu0 %43
    %v46 = vmul.f32 %v44, %v38
    %v47 = vmul.f32 %v44, %v39
    %v48 = vsel %vm40, %v38, %v46
    %v49 = vsel %vm41, %v39, %v47
    %50 = vst [vmem:[#allocation5] sm:$0xff] %v48
    %51 = vst [vmem:[#allocation5 + $0x8] sm:$0xff] %v49
    // Predicated region
    $region14: #{tpu_custom_call.1} parent=1 // pred_check
      _
    $region15: #{tpu_custom_call.1} parent=1 // pred_check_branch
      %53 = sbr.rel (0) target = $region17
    $region16: #{tpu_custom_call.1} parent=1 // pred_region
      %s55 = ssub.s32 256, 256
      %56 = vsyncadd [#allocation4], %s55
      %s58 = sshll.u32 [#allocation5], 4
      %s59 = int_to_ptr.vmem [resolvable:$true] %s58
      %61 = dma.vmem_to_hbm [thread:$0]  %s59, 256, %s2, [#allocation4]
    $region17: #{tpu_custom_call.1} parent=1 // pred_fallthru
      _
    // Predicated region
    $region18: #{tpu_custom_call.1} parent=1 // pred_check
      _
    $region19: #{tpu_custom_call.1} parent=1 // pred_check_branch
      %63 = sbr.rel (0) target = $region21
    $region20: #{tpu_custom_call.1} parent=1 // pred_region
      %64 = dma.done [#allocation4], 256
    $region21: #{tpu_custom_call.1} parent=1 // pred_fallthru
      _
    %65 = vsyncpa [#allocation3], 1
    %66 = vsyncpa [#allocation4], 1

</llo_original>
